<compile_context>
chip_gen: v5e
topology: v5e:2x2
jax: 0.10.0
libtpu: 0.0.40
codegen_flags: <defaults>
</compile_context>

<pallas_src>
import functools

import jax
import jax.numpy as jnp
from jax import lax
from jax.experimental import pallas as pl
from jax.experimental.pallas import tpu as pltpu

GAMMA = 2                    # module default
ALPHA = [0.3, 0.6, 0.1]      # module default

# Double-buffered I/O is ~128*tn bytes and the live (1,tn) f32 temporaries add
# a few more tn*32; 48 MiB covers the default tn=65536 with headroom and stays
# inside v7x's 64 MiB physical per-TC VMEM (v5e/v6e have 128 MiB physical).
_VMEM_LIMIT_BYTES = 48 * 1024 * 1024


def _default_num_partitions():
    """2 on v7x (2 TensorCores per chip), 1 on single-TC chips (v5e/v6e)."""
    try:
        kind = jax.devices()[0].device_kind.lower()
        if "v7" in kind:
            return 2
    except Exception:
        pass
    return 1


def _focal_loss_kernel(pred_ref, tgt_ref, out_ref, acc_ref, *,
                       alpha, gamma, n_total, tiles_per_part, tile_n):
    """One grid step: focal-loss partial sum over a (C, TILE_N) slab.

    pred_ref: (C, TN) logits (input dtype)   tgt_ref: (1, TN) int32 labels
    out_ref : (1, 8, 128) f32 per-partition result slab (written at last step)
    acc_ref : (1, 1) f32 running partial sum (scratch, persists across steps)
    """
    p = pl.program_id(0)          # partition (TensorCore) index
    i = pl.program_id(1)          # N-tile index within this partition

    @pl.when(i == 0)
    def _():
        acc_ref[...] = jnp.zeros_like(acc_ref)

    num_classes = pred_ref.shape[0]
    tgt = tgt_ref[...]                                    # (1, TN) int32

    # Per-class rows as lane-dense (1, TN) vectors; cast to f32 in-VMEM so bf16
    # logits could stay bf16 in HBM (math stays f32: required on v5e, safe all).
    rows = [pred_ref[c:c + 1, :].astype(jnp.float32) for c in range(num_classes)]

    # Stable log-softmax pieces, all (1, TN); C is tiny & static so the class
    # reductions are plain VPU maximum/add chains (no XLU, no (C,TN) temps).
    m = rows[0]
    for c in range(1, num_classes):
        m = jnp.maximum(m, rows[c])
    shifted = [r - m for r in rows]
    exps = [jnp.exp(s) for s in shifted]                  # single EUP exp pass
    sumexp = exps[0]
    for c in range(1, num_classes):
        sumexp = sumexp + exps[c]
    lse = jnp.log(sumexp)

    # "Gather" by target via a select chain; alpha enters as scalar literals
    # (no captured array constant, no (1, C) DMA).
    gathered_shift = shifted[num_classes - 1]
    gathered_exp = exps[num_classes - 1]
    alpha_t = float(alpha[num_classes - 1])
    for c in range(num_classes - 2, -1, -1):
        sel = tgt == c
        gathered_shift = jnp.where(sel, shifted[c], gathered_shift)
        gathered_exp = jnp.where(sel, exps[c], gathered_exp)
        alpha_t = jnp.where(sel, float(alpha[c]), alpha_t)

    logpt = gathered_shift - lse                          # log_softmax[target]
    ce_loss = -logpt
    pt = gathered_exp / sumexp                            # exp(logpt), no 2nd exp
    omp = 1.0 - pt
    if gamma == 2:
        mod = omp * omp                                   # single VPU multiply
    else:
        mod = jnp.maximum(omp, 0.0) ** gamma              # pt can exceed 1 by an ulp
    focal = alpha_t * mod * ce_loss                       # (1, TN) f32

    # Ragged-edge / out-of-range masking (replaces wrapper-side jnp.pad):
    # a lane contributes only if its global sample index is < n_total.  The
    # select also zeroes any NaN/Inf computed from garbage lanes of a
    # partially-filled edge block.
    tile_idx = p * tiles_per_part + i
    lane = lax.broadcasted_iota(jnp.int32, tgt.shape, 1)
    valid = (tile_idx * tile_n + lane) < n_total
    focal = jnp.where(valid, focal, 0.0)

    acc_ref[...] += jnp.sum(focal, axis=1, keepdims=True)

    @pl.when(i == pl.num_programs(1) - 1)
    def _():
        # Lane/sublane-aligned output slab; the wrapper reads element [p, 0, 0].
        out_ref[...] = jnp.broadcast_to(acc_ref[...], out_ref.shape)


def multiclass_focal_loss(pred, target, alpha=ALPHA, gamma=GAMMA, *,
                          tile_n=65536, num_partitions=None):
    """pred: (N, C) logits, target: (N,) int -> scalar f32 (reduction='mean')."""
    N, C = pred.shape
    if num_partitions is None:
        num_partitions = _default_num_partitions()

    # Lane-dense layout plumbing: class dim on sublanes, batch on lanes.
    # TODO(synk): have the logits producer emit (C, N) bf16 (and int8 targets)
    # directly -- this transpose is a full HBM read+write pass that the kernel
    # itself (a single streaming read) does not need.
    pred_t = jnp.transpose(pred)                        # (C, N), keep input dtype
    tgt_t = target.astype(jnp.int32).reshape(1, N)

    # Tile over N (lanes): either one full-array block (any N) or 128-multiple
    # tiles with the ragged last tile masked in-kernel (no padding copies).
    tn = max(128, (int(tile_n) // 128) * 128)
    if N <= tn:
        tn = N
    n_tiles = (N + tn - 1) // tn
    num_partitions = max(1, min(int(num_partitions), n_tiles))
    tiles_per_part = (n_tiles + num_partitions - 1) // num_partitions
    last_tile = n_tiles - 1

    def tile_map(p, i):
        # Clamp so a fully-out-of-range logical tile of the last partition just
        # re-reads a valid block; its lanes are masked to zero in-kernel.
        return (0, jnp.minimum(p * tiles_per_part + i, last_tile))

    kernel = functools.partial(
        _focal_loss_kernel,
        alpha=tuple(float(a) for a in alpha),
        gamma=gamma,
        n_total=int(N),
        tiles_per_part=int(tiles_per_part),
        tile_n=int(tn),
    )

    out = pl.pallas_call(
        kernel,
        out_shape=jax.ShapeDtypeStruct((num_partitions, 8, 128), jnp.float32),
        grid=(num_partitions, tiles_per_part),
        in_specs=[
            pl.BlockSpec((C, tn), tile_map),            # logits: classes on sublanes
            pl.BlockSpec((1, tn), tile_map),            # targets
        ],
        out_specs=pl.BlockSpec((1, 8, 128), lambda p, i: (p, 0, 0)),
        scratch_shapes=[pltpu.VMEM((1, 1), jnp.float32)],
        compiler_params=pltpu.CompilerParams(
            # Partition axis -> megacore-parallel (2 TCs on v7x); the N-tile
            # axis is the streamed reduction.
            dimension_semantics=("parallel", "arbitrary"),
            vmem_limit_bytes=_VMEM_LIMIT_BYTES,
        ),
    )(pred_t, tgt_t)

    partial_sums = out[:, 0, 0]                         # one partial per partition
    return jnp.sum(partial_sums) / N                    # mean over the TRUE N


def reference_focal_loss(pred, target, alpha=ALPHA, gamma=GAMMA):
    """Pure-JAX reference mirroring the PyTorch forward (reduction='mean')."""
    alpha_t = jnp.asarray(alpha, jnp.float32)[target]
    log_softmax = jax.nn.log_softmax(pred.astype(jnp.float32), axis=1)
    logpt = jnp.take_along_axis(log_softmax, target.reshape(-1, 1), axis=1).reshape(-1)
    ce_loss = -logpt
    pt = jnp.exp(logpt)
    focal = alpha_t * (1.0 - pt) ** gamma * ce_loss
    return jnp.mean(focal)


if __name__ == "__main__":
    key = jax.random.PRNGKey(0)
    k1, k2, k3, k4 = jax.random.split(key, 4)

    # Small shapes consistent with the module: N logits over 3 classes.
    N, C = 300, 3
    pred = jax.random.normal(k1, (N, C), dtype=jnp.float32)
    target = jax.random.randint(k2, (N,), 0, C, dtype=jnp.int32)
    ref = reference_focal_loss(pred, target, ALPHA)

    # Multi-tile path with a ragged (masked) last tile, single partition.
    loss = jax.block_until_ready(
        multiclass_focal_loss(pred, target, ALPHA, tile_n=128, num_partitions=1))
    assert jnp.allclose(loss, ref, atol=1e-5, rtol=1e-5), (loss, ref)

    # Two-partition (v7x-style) path, including a fully-out-of-range logical tile.
    loss2 = jax.block_until_ready(
        multiclass_focal_loss(pred, target, ALPHA, tile_n=128, num_partitions=2))
    assert jnp.allclose(loss2, ref, atol=1e-5, rtol=1e-5), (loss2, ref)

    # Default tile (single full-array block at this small N), auto partitions.
    loss3 = jax.block_until_ready(multiclass_focal_loss(pred, target, ALPHA))
    assert jnp.allclose(loss3, ref, atol=1e-5, rtol=1e-5), (loss3, ref)

    # Tiny batch sanity check.
    pred_s = jax.random.normal(k3, (8, C), dtype=jnp.float32)
    target_s = jax.random.randint(k4, (8,), 0, C, dtype=jnp.int32)
    loss_s = jax.block_until_ready(multiclass_focal_loss(pred_s, target_s, ALPHA))
    ref_s = reference_focal_loss(pred_s, target_s, ALPHA)
    assert jnp.allclose(loss_s, ref_s, atol=1e-5, rtol=1e-5), (loss_s, ref_s)

    print("KERNEL_OK")
</pallas_src>

<mosaic_0001>
module attributes {stable_mosaic.version = 11 : i64} {
  func.func @_focal_loss_kernel(%arg0: i32, %arg1: i32, %arg2: memref<3x128xf32, #tpu.memory_space<vmem>>, %arg3: memref<1x128xi32, #tpu.memory_space<vmem>>, %arg4: memref<1x8x128xf32, #tpu.memory_space<vmem>>, %arg5: memref<1x1xf32, #tpu.memory_space<vmem>>) attributes {dimension_semantics = [#tpu.dimension_semantics<parallel>, #tpu.dimension_semantics<arbitrary>], iteration_bounds = array<i64: 1, 3>, scalar_prefetch = 0 : i64, scratch_operands = 1 : i64, tpu.core_type = #tpu.core_type<tc>, window_params = [{transform_indices = @transform_0, window_bounds = array<i64: 3, 128>}, {transform_indices = @transform_1, window_bounds = array<i64: 1, 128>}, {transform_indices = @transform_2, window_bounds = array<i64: 1, 8, 128>}]} {
    %c0_i32 = arith.constant 0 : i32
    %0 = arith.cmpi eq, %arg1, %c0_i32 : i32
    %1 = arith.extui %0 : i1 to i32
    %c0_i32_0 = arith.constant 0 : i32
    %2 = arith.cmpi ne, %1, %c0_i32_0 : i32
    scf.if %2 {
      %cst_18 = arith.constant 0.000000e+00 : f32
      %58 = vector.broadcast %cst_18 : f32 to vector<1x1xf32>
      %c0_19 = arith.constant 0 : index
      %c0_20 = arith.constant 0 : index
      %59 = vector.load %arg5[%c0_19, %c0_20] : memref<1x1xf32, #tpu.memory_space<vmem>>, vector<1x1xf32>
      tpu.vector_store %arg5[%c0_19, %c0_20], %58 {strides = array<i32>} : memref<1x1xf32, #tpu.memory_space<vmem>>, vector<1x1xf32>,
    } else {
    }
    %c0 = arith.constant 0 : index
    %c0_1 = arith.constant 0 : index
    %3 = vector.load %arg3[%c0, %c0_1] : memref<1x128xi32, #tpu.memory_space<vmem>>, vector<1x128xi32>
    %c0_2 = arith.constant 0 : index
    %c0_3 = arith.constant 0 : index
    %4 = vector.load %arg2[%c0_2, %c0_3] : memref<3x128xf32, #tpu.memory_space<vmem>>, vector<1x128xf32>
    %c1 = arith.constant 1 : index
    %c0_4 = arith.constant 0 : index
    %5 = vector.load %arg2[%c1, %c0_4] : memref<3x128xf32, #tpu.memory_space<vmem>>, vector<1x128xf32>
    %c2 = arith.constant 2 : index
    %c0_5 = arith.constant 0 : index
    %6 = vector.load %arg2[%c2, %c0_5] : memref<3x128xf32, #tpu.memory_space<vmem>>, vector<1x128xf32>
    %7 = arith.maximumf %4, %5 : vector<1x128xf32>
    %8 = arith.maximumf %7, %6 : vector<1x128xf32>
    %9 = arith.subf %4, %8 : vector<1x128xf32>
    %10 = arith.subf %5, %8 : vector<1x128xf32>
    %11 = arith.subf %6, %8 : vector<1x128xf32>
    %12 = math.exp %9 : vector<1x128xf32>
    %13 = math.exp %10 : vector<1x128xf32>
    %14 = math.exp %11 : vector<1x128xf32>
    %15 = arith.addf %12, %13 : vector<1x128xf32>
    %16 = arith.addf %15, %14 : vector<1x128xf32>
    %17 = math.log %16 : vector<1x128xf32>
    %c1_i32 = arith.constant 1 : i32
    %18 = vector.broadcast %c1_i32 : i32 to vector<1x128xi32>
    %19 = arith.cmpi eq, %3, %18 : vector<1x128xi32>
    %20 = arith.select %19, %10, %11 : vector<1x128xi1>, vector<1x128xf32>
    %21 = arith.select %19, %13, %14 : vector<1x128xi1>, vector<1x128xf32>
    %cst = arith.constant 6.000000e-01 : f32
    %cst_6 = arith.constant 1.000000e-01 : f32
    %22 = vector.broadcast %cst : f32 to vector<1x128xf32>
    %23 = vector.broadcast %cst_6 : f32 to vector<1x128xf32>
    %24 = arith.select %19, %22, %23 : vector<1x128xi1>, vector<1x128xf32>
    %c0_i32_7 = arith.constant 0 : i32
    %25 = vector.broadcast %c0_i32_7 : i32 to vector<1x128xi32>
    %26 = arith.cmpi eq, %3, %25 : vector<1x128xi32>
    %27 = arith.select %26, %9, %20 : vector<1x128xi1>, vector<1x128xf32>
    %28 = arith.select %26, %12, %21 : vector<1x128xi1>, vector<1x128xf32>
    %cst_8 = arith.constant 3.000000e-01 : f32
    %29 = vector.broadcast %cst_8 : f32 to vector<1x128xf32>
    %30 = arith.select %26, %29, %24 : vector<1x128xi1>, vector<1x128xf32>
    %31 = arith.subf %27, %17 : vector<1x128xf32>
    %cst_9 = arith.constant 0.000000e+00 : f32
    %32 = vector.broadcast %cst_9 : f32 to vector<1x128xf32>
    %33 = arith.subf %32, %31 : vector<1x128xf32>
    %34 = arith.divf %28, %16 : vector<1x128xf32>
    %cst_10 = arith.constant 1.000000e+00 : f32
    %35 = vector.broadcast %cst_10 : f32 to vector<1x128xf32>
    %36 = arith.subf %35, %34 : vector<1x128xf32>
    %37 = arith.mulf %36, %36 : vector<1x128xf32>
    %38 = arith.mulf %30, %37 : vector<1x128xf32>
    %39 = arith.mulf %38, %33 : vector<1x128xf32>
    %c3_i32 = arith.constant 3 : i32
    %40 = arith.muli %arg0, %c3_i32 : i32
    %41 = arith.addi %40, %arg1 : i32
    %42 = tpu.iota {dimensions = array<i32: 1>} : vector<1x128xi32>
    %c128_i32 = arith.constant 128 : i32
    %43 = arith.muli %41, %c128_i32 : i32
    %44 = vector.broadcast %43 : i32 to vector<1x128xi32>
    %45 = arith.addi %44, %42 : vector<1x128xi32>
    %c300_i32 = arith.constant 300 : i32
    %46 = vector.broadcast %c300_i32 : i32 to vector<1x128xi32>
    %47 = arith.cmpi slt, %45, %46 : vector<1x128xi32>
    %cst_11 = arith.constant 0.000000e+00 : f32
    %48 = vector.broadcast %cst_11 : f32 to vector<1x128xf32>
    %49 = arith.select %47, %39, %48 : vector<1x128xi1>, vector<1x128xf32>
    %c0_12 = arith.constant 0 : index
    %c0_13 = arith.constant 0 : index
    %50 = vector.load %arg5[%c0_12, %c0_13] : memref<1x1xf32, #tpu.memory_space<vmem>>, vector<1x1xf32>
    %cst_14 = arith.constant dense<0.000000e+00> : vector<1xf32>
    %51 = vector.multi_reduction <add>, %49, %cst_14 [1] : vector<1x128xf32> to vector<1xf32>
    %52 = vector.shape_cast %51 : vector<1xf32> to vector<1x1xf32>
    %53 = arith.addf %50, %52 : vector<1x1xf32>
    %c0_15 = arith.constant 0 : index
    %c0_16 = arith.constant 0 : index
    %54 = vector.load %arg5[%c0_15, %c0_16] : memref<1x1xf32, #tpu.memory_space<vmem>>, vector<1x1xf32>
    tpu.vector_store %arg5[%c0_15, %c0_16], %53 {strides = array<i32>} : memref<1x1xf32, #tpu.memory_space<vmem>>, vector<1x1xf32>,
    %c2_i32 = arith.constant 2 : i32
    %55 = arith.cmpi eq, %arg1, %c2_i32 : i32
    %56 = arith.extui %55 : i1 to i32
    %c0_i32_17 = arith.constant 0 : i32
    %57 = arith.cmpi ne, %56, %c0_i32_17 : i32
    scf.if %57 {
      %c0_18 = arith.constant 0 : index
      %c0_19 = arith.constant 0 : index
      %58 = vector.load %arg5[%c0_18, %c0_19] : memref<1x1xf32, #tpu.memory_space<vmem>>, vector<1x1xf32>
      %59 = vector.shape_cast %58 : vector<1x1xf32> to vector<1x1x1xf32>
      %60 = vector.broadcast %59 : vector<1x1x1xf32> to vector<1x8x128xf32>
      %c0_20 = arith.constant 0 : index
      %c0_21 = arith.constant 0 : index
      %c0_22 = arith.constant 0 : index
      %61 = vector.load %arg4[%c0_20, %c0_21, %c0_22] : memref<1x8x128xf32, #tpu.memory_space<vmem>>, vector<1x8x128xf32>
      tpu.vector_store %arg4[%c0_20, %c0_21, %c0_22], %60 {strides = array<i32>} : memref<1x8x128xf32, #tpu.memory_space<vmem>>, vector<1x8x128xf32>,
    } else {
    }
    return
  }
  func.func @transform_0(%arg0: i32, %arg1: i32) -> (i32, i32) {
    %c3_i32 = arith.constant 3 : i32
    %0 = arith.muli %arg0, %c3_i32 : i32
    %1 = arith.addi %0, %arg1 : i32
    %c2_i32 = arith.constant 2 : i32
    %2 = arith.minsi %1, %c2_i32 : i32
    %c0_i32 = arith.constant 0 : i32
    %c0_i32_0 = arith.constant 0 : i32
    return %c0_i32, %2 : i32, i32
  }
  func.func @transform_1(%arg0: i32, %arg1: i32) -> (i32, i32) {
    %c3_i32 = arith.constant 3 : i32
    %0 = arith.muli %arg0, %c3_i32 : i32
    %1 = arith.addi %0, %arg1 : i32
    %c2_i32 = arith.constant 2 : i32
    %2 = arith.minsi %1, %c2_i32 : i32
    %c0_i32 = arith.constant 0 : i32
    %c0_i32_0 = arith.constant 0 : i32
    return %c0_i32, %2 : i32, i32
  }
  func.func @transform_2(%arg0: i32, %arg1: i32) -> (i32, i32, i32) {
    %c0_i32 = arith.constant 0 : i32
    %c0_i32_0 = arith.constant 0 : i32
    %c0_i32_1 = arith.constant 0 : i32
    return %arg0, %c0_i32, %c0_i32_0 : i32, i32, i32
  }
}

</mosaic_0001>

<llo_original>
// kernel: tpu_custom_call.1
$region0: #{tpu_custom_call.1}
  #allocation0 [shape = 'u32[]', space=smem, size = 0x4, offset = 0x4, fixed_abs, tag = 'smem constant byte address 0x4 - core index']
  #allocation1 [shape = 'u32[72,128]{1,0:T(1,128)}', space=vmem, size = 0x9000, scoped, tag = 'internal scratch']
  #allocation2 [shape = 'f32[1,1]{1,0:T(1,128)}', space=vmem, size = 0x200, scoped, tag = 'scratch operand']
  %s0 = inlined_call_operand.hbm [shape: f32[3,300], index: 0, kind: input, shape index: {}]
  %s1 = inlined_call_operand.hbm [shape: s32[1,300], index: 1, kind: input, shape index: {}]
  %s2 = inlined_call_operand.hbm [shape: f32[1,8,128], index: 2, kind: output, shape index: {}]
  %s3 = sld [smem:[#allocation0]]
  $region57: #{tpu_custom_call.1} parent=0
    _
  %s5 = ssub.s32 1, %s3
  %s6 = scalar_select 0, %s5, %s3
  $region1: #{tpu_custom_call.1} parent=0
    #allocation3 [shape = 'u8[4096]{0}', space=vmem, size = 0x1000, scoped, tag = 'input window, operand 0']
    #allocation4 [shape = 's32[2]{0}', space=sflag, size = 0x8, scoped, tag = 'scoped memory for tpu_custom_call.1']
    #allocation5 [shape = 's32[2]{0}', space=sflag, size = 0x8, scoped, tag = 'scoped memory for tpu_custom_call.1']
    #allocation6 [shape = 'u8[1024]{0}', space=vmem, size = 0x400, scoped, tag = 'input window, operand 1']
    #allocation7 [shape = 's32[2]{0}', space=sflag, size = 0x8, scoped, tag = 'scoped memory for tpu_custom_call.1']
    #allocation8 [shape = 'u8[4096]{0}', space=vmem, size = 0x1000, scoped, tag = 'output window, operand 0, single buffered']
    %7 = vsyncpa [#allocation4], 0
    %s8 = scalar_lea.sflag [#allocation4], 1
    %9 = vsyncpa %s8, 0
    %10 = vsyncpa [#allocation7], 0
    %s11 = scalar_lea.sflag [#allocation7], 1
    %12 = vsyncpa %s11, 0
    %13 = vsyncpa [#allocation5], 0
    loop: start=0, step=1, limit=5
    $region2: #{tpu_custom_call.1} parent=1 // loop_pre_header
      _
    $region3: #{tpu_custom_call.1} parent=1 // loop_header
      %s15 = sphi 0, %s19
      %p16 = scmp.ge.s32.totalorder %s15, 5
      %s22 = sphi 0, %s34
      %s23 = sphi 0, %s30
      %s24 = sphi 0, %s22
      %s25 = sphi 0, %s23
      %s26 = sphi 0, %s24
      %s27 = sphi 0, %s25
      %s45 = sphi 0, %s47
      %s48 = sphi 0, %s45
      %s49 = sphi 0, %s48
      %s65 = sphi 0, %s49
      %s79 = sphi 0, %s81
      %s82 = sphi 0, %s79
      %s83 = sphi 0, %s82
      %s99 = sphi 0, %s83
      %s105 = sphi 0, %s107
      %s108 = sphi 0, %s105
      %s109 = sphi 0, %s108
      %s125 = sphi 0, %s109
    $region4: #{tpu_custom_call.1} parent=1 // loop_header_branch
      %18 = sbr.rel (%p16) target = $region8
    $region5: #{tpu_custom_call.1} parent=1 // loop_body
      %s20 = ssub.s32 %s15, 1
      %s21 = ssub.s32 %s15, 2
      %s28 = sadd.s32 1, %s23
      %p29 = scmp.ge.s32.totalorder %s28, 3
      %s30 = scalar_select %p29, 0, %s28
      %s31 = sadd.s32 1, %s22
      %s32 = scalar_select %p29, %s31, %s22
      %p33 = scmp.ge.s32.totalorder %s32, 1
      %s34 = scalar_select %p33, 0, %s32
      %s35 = smul.u32 %s22, 3
      %s36 = sadd.s32 %s35, %s23
      %p37 = scmp.lt.s32.totalorder %s36, 2
      %s38 = scalar_select %p37, %s36, 2
      %s39 = smul.u32 %s34, 3
      %s40 = sadd.s32 %s39, %s30
      %p41 = scmp.lt.s32.totalorder %s40, 2
      %s42 = scalar_select %p41, %s40, 2
      %s43 = ssub.s32 %s38, %s42
      %p44 = scmp.eq.s32.totalorder %s43, 0
      %s46 = sadd.s32 %s45, 1
      %s47 = scalar_select %p44, %s45, %s46
      %p50 = pneg %p44
      %p51 = scmp.eq.s32.totalorder %s15, 2
      %p52 = por %p50, %p51
      %p53 = scmp.ne.s32.totalorder %s45, %s48
      %p54 = scmp.eq.s32.totalorder %s15, 0
      %p55 = por %p53, %p54
      %p56 = scmp.ne.s32.totalorder %s45, %s48
      %p57 = scmp.eq.s32.totalorder %s20, 2
      %p58 = por %p56, %p57
      %p59 = scmp.ne.s32.totalorder %s48, %s49
      %p60 = scmp.eq.s32.totalorder %s20, 0
      %p61 = por %p59, %p60
      %p62 = scmp.ne.s32.totalorder %s48, %s49
      %p63 = scmp.eq.s32.totalorder %s21, 2
      %p64 = por %p62, %p63
      %p66 = scmp.ne.s32.totalorder %s49, %s65
      %p67 = scmp.eq.s32.totalorder %s21, 0
      %p68 = por %p66, %p67
      %s69 = smul.u32 %s22, 3
      %s70 = sadd.s32 %s69, %s23
      %p71 = scmp.lt.s32.totalorder %s70, 2
      %s72 = scalar_select %p71, %s70, 2
      %s73 = smul.u32 %s34, 3
      %s74 = sadd.s32 %s73, %s30
      %p75 = scmp.lt.s32.totalorder %s74, 2
      %s76 = scalar_select %p75, %s74, 2
      %s77 = ssub.s32 %s72, %s76
      %p78 = scmp.eq.s32.totalorder %s77, 0
      %s80 = sadd.s32 %s79, 1
      %s81 = scalar_select %p78, %s79, %s80
      %p84 = pneg %p78
      %p85 = scmp.eq.s32.totalorder %s15, 2
      %p86 = por %p84, %p85
      %p87 = scmp.ne.s32.totalorder %s79, %s82
      %p88 = scmp.eq.s32.totalorder %s15, 0
      %p89 = por %p87, %p88
      %p90 = scmp.ne.s32.totalorder %s79, %s82
      %p91 = scmp.eq.s32.totalorder %s20, 2
      %p92 = por %p90, %p91
      %p93 = scmp.ne.s32.totalorder %s82, %s83
      %p94 = scmp.eq.s32.totalorder %s20, 0
      %p95 = por %p93, %p94
      %p96 = scmp.ne.s32.totalorder %s82, %s83
      %p97 = scmp.eq.s32.totalorder %s21, 2
      %p98 = por %p96, %p97
      %p100 = scmp.ne.s32.totalorder %s83, %s99
      %p101 = scmp.eq.s32.totalorder %s21, 0
      %p102 = por %p100, %p101
      %s103 = ssub.s32 %s22, %s34
      %p104 = scmp.eq.s32.totalorder %s103, 0
      %s106 = sadd.s32 %s105, 1
      %s107 = scalar_select %p104, %s105, %s106
      %p110 = pneg %p104
      %p111 = scmp.eq.s32.totalorder %s15, 2
      %p112 = por %p110, %p111
      %p113 = scmp.ne.s32.totalorder %s105, %s108
      %p114 = scmp.eq.s32.totalorder %s15, 0
      %p115 = por %p113, %p114
      %p116 = scmp.ne.s32.totalorder %s105, %s108
      %p117 = scmp.eq.s32.totalorder %s20, 2
      %p118 = por %p116, %p117
      %p119 = scmp.ne.s32.totalorder %s108, %s109
      %p120 = scmp.eq.s32.totalorder %s20, 0
      %p121 = por %p119, %p120
      %p122 = scmp.ne.s32.totalorder %s108, %s109
      %p123 = scmp.eq.s32.totalorder %s21, 2
      %p124 = por %p122, %p123
      %p126 = scmp.ne.s32.totalorder %s109, %s125
      %p127 = scmp.eq.s32.totalorder %s21, 0
      %p128 = por %p126, %p127
      %p129 = scmp.le.s32.totalorder 1, %s15
      %p130 = scmp.lt.s32.totalorder %s15, 4
      %p131 = pnand %p129, %p130
      %p132 = pneg %p131
      // Predicated region
      $region9: #{tpu_custom_call.1} parent=5 // pred_check
        _
      $region10: #{tpu_custom_call.1} parent=5 // pred_check_branch
        %134 = sbr.rel (%p131) target = $region12
      $region11: #{tpu_custom_call.1} parent=5 // pred_region
        %s135 = ssub.s32 %s15, 1
      $region12: #{tpu_custom_call.1} parent=5 // pred_fallthru
        _
      %p136 = scmp.lt.s32.totalorder %s15, 3
      // Predicated region
      $region13: #{tpu_custom_call.1} parent=5 // pred_check
        %p137 = pneg %p136
      $region14: #{tpu_custom_call.1} parent=5 // pred_check_branch
        %139 = sbr.rel (%p137) target = $region16
      $region15: #{tpu_custom_call.1} parent=5 // pred_region
        // Predicated region
        $region17: #{tpu_custom_call.1} parent=15 // pred_check
          %p140 = pneg %p55
        $region18: #{tpu_custom_call.1} parent=15 // pred_check_branch
          %142 = sbr.rel (%p140) target = $region20
        $region19: #{tpu_custom_call.1} parent=15 // pred_region
          %s143 = sand.u32 %s45, 1
          %s144 = scalar_lea.sflag [#allocation4], %s143
          %s145 = sand.u32 %s45, 1
          %s146 = smul.addr %s145, 4
          %s147 = scalar_lea.vmem [#allocation3], %s146
          %s148 = smul.u32 %s22, 3
          %s149 = sadd.s32 %s148, %s23
          %p150 = scmp.lt.s32.totalorder %s149, 2
          %s151 = scalar_select %p150, %s149, 2
          %153 = vsyncadd %s144, 0
          %s154 = smul.addr %s151, 4
          %s155 = scalar_lea.hbm %s0, %s154
          %s157 = sshll.u32 %s155, 4
          %s158 = int_to_ptr.hbm [resolvable:$true] %s157
          %s159 = sshll.u32 %s147, 4
          %s160 = int_to_ptr.vmem [resolvable:$true] %s159
          %162 = dma.hbm_to_vmem [thread:$0]  %s158, 64, %s160, %s144
        $region20: #{tpu_custom_call.1} parent=15 // pred_fallthru
          _
        // Predicated region
        $region21: #{tpu_custom_call.1} parent=15 // pred_check
          %p163 = pneg %p89
        $region22: #{tpu_custom_call.1} parent=15 // pred_check_branch
          %165 = sbr.rel (%p163) target = $region24
        $region23: #{tpu_custom_call.1} parent=15 // pred_region
          %s166 = sand.u32 %s79, 1
          %s167 = scalar_lea.sflag [#allocation7], %s166
          %s168 = sand.u32 %s79, 1
          %s169 = scalar_lea.vmem [#allocation6], %s168
          %s170 = smul.u32 %s22, 3
          %s171 = sadd.s32 %s170, %s23
          %p172 = scmp.lt.s32.totalorder %s171, 2
          %s173 = scalar_select %p172, %s171, 2
          %175 = vsyncadd %s167, 0
          %s176 = scalar_lea.hbm %s1, %s173
          %s178 = sshll.u32 %s176, 4
          %s179 = int_to_ptr.hbm [resolvable:$true] %s178
          %s180 = sshll.u32 %s169, 4
          %s181 = int_to_ptr.vmem [resolvable:$true] %s180
          %183 = dma.hbm_to_vmem [thread:$0]  %s179, 16, %s181, %s167
        $region24: #{tpu_custom_call.1} parent=15 // pred_fallthru
          _
      $region16: #{tpu_custom_call.1} parent=5 // pred_fallthru
        _
      %p184 = scmp.le.s32.totalorder 1, %s15
      %p185 = scmp.lt.s32.totalorder %s15, 4
      %p186 = pnand %p184, %p185
      %p187 = pneg %p186
      // Predicated region
      $region25: #{tpu_custom_call.1} parent=5 // pred_check
        _
      $region26: #{tpu_custom_call.1} parent=5 // pred_check_branch
        %189 = sbr.rel (%p186) target = $region28
      $region27: #{tpu_custom_call.1} parent=5 // pred_region
        %s190 = ssub.s32 %s15, 1
        %s191 = sand.u32 %s48, 1
        %s192 = scalar_lea.sflag [#allocation4], %s191
        %s193 = sand.u32 %s48, 1
        %s194 = smul.addr %s193, 4
        %s195 = scalar_lea.vmem [#allocation3], %s194
        // Predicated region
        $region29: #{tpu_custom_call.1} parent=27 // pred_check
          %p196 = pneg %p61
        $region30: #{tpu_custom_call.1} parent=27 // pred_check_branch
          %198 = sbr.rel (%p196) target = $region32
        $region31: #{tpu_custom_call.1} parent=27 // pred_region
          %200 = dma.done %s192, 64
        $region32: #{tpu_custom_call.1} parent=27 // pred_fallthru
          _
        %s201 = sand.u32 %s82, 1
        %s202 = scalar_lea.sflag [#allocation7], %s201
        %s203 = sand.u32 %s82, 1
        %s204 = scalar_lea.vmem [#allocation6], %s203
        // Predicated region
        $region33: #{tpu_custom_call.1} parent=27 // pred_check
          %p205 = pneg %p95
        $region34: #{tpu_custom_call.1} parent=27 // pred_check_branch
          %207 = sbr.rel (%p205) target = $region36
        $region35: #{tpu_custom_call.1} parent=27 // pred_region
          %209 = dma.done %s202, 16
        $region36: #{tpu_custom_call.1} parent=27 // pred_fallthru
          _
        %s210 = sand.u32 %s48, 1
        %s211 = scalar_lea.sflag [#allocation4], %s210
        %s212 = sand.u32 %s48, 1
        %s213 = smul.addr %s212, 4
        %s214 = scalar_lea.vmem [#allocation3], %s213
        %p215 = pneg %p61
        %p216 = pneg %p58
        %s217 = sand.u32 %s82, 1
        %s218 = scalar_lea.sflag [#allocation7], %s217
        %s219 = sand.u32 %s82, 1
        %s220 = scalar_lea.vmem [#allocation6], %s219
        %p221 = pneg %p95
        %p222 = pneg %p92
        %p223 = pneg %p121
        %p224 = pneg %p118
        %s225 = smul.u32 %s24, 3
        %s226 = sadd.s32 %s225, %s25
        %p227 = scmp.lt.s32.totalorder %s226, 2
        %s228 = scalar_select %p227, %s226, 2
        %s229 = smul.u32 %s24, 3
        %s230 = sadd.s32 %s229, %s25
        %p231 = scmp.lt.s32.totalorder %s230, 2
        %s232 = scalar_select %p231, %s230, 2
        %p233 = scmp.eq.s32.totalorder %s25, 0
        // Predicated region
        $region37: #{tpu_custom_call.1} parent=27 // pred_check
          %p234 = pneg %p233
        $region38: #{tpu_custom_call.1} parent=27 // pred_check_branch
          %236 = sbr.rel (%p234) target = $region40
        $region39: #{tpu_custom_call.1} parent=27 // pred_region
          %vm237 = vcmask 0
          %238 = vst.msk [vmem:[#allocation2] sm:$0x1] %vm237, 0.0
        $region40: #{tpu_custom_call.1} parent=27 // pred_fallthru
          _
        %v239 = vld [vmem:[%s204] sm:$0x1]
        %v240 = vld [vmem:[%s195] sm:$0x1]
        %v241 = vld [vmem:[%s195 + $0x1] sm:$0x1]
        %v242 = vld [vmem:[%s195 + $0x2] sm:$0x1]
        %v243 = vmax.f32 %v240, %v241
        %v244 = vmax.f32 %v243, %v242
        %v245 = vsub.f32 %v240, %v244
        %v246 = vsub.f32 %v241, %v244
        %v247 = vsub.f32 %v242, %v244
        %v248 = vmul.f32 %v245, 1.442695
        %v249 = vpow.pop %v248
        %v250 = vmul.f32 %v246, 1.442695
        %v251 = vpow.pop %v250
        %v252 = vmul.f32 %v247, 1.442695
        %v253 = vpow.pop %v252
        %v254 = vadd.f32 %v249, %v251
        %v255 = vadd.f32 %v254, %v253
        %v256 = vlog2.pop %v255
        %v257 = vmul.f32 %v256, 0.6931472
        %vm258 = vcmp.eq.s32.totalorder %v239, 1
        %v259 = vsel %vm258, %v246, %v247
        %v260 = vsel %vm258, %v251, %v253
        %v261 = vsel %vm258, 0.6, 0.1
        %vm262 = vcmp.eq.s32.totalorder %v239, 0
        %v263 = vsel %vm262, %v245, %v259
        %v264 = vsel %vm262, %v249, %v260
        %v265 = vsel %vm262, 0.3, %v261
        %v266 = vsub.f32 %v263, %v257
        %v267 = vsub.f32 0.0, %v266
        %v268 = vrcp.pop %v255
        %v269 = vmul.f32 %v255, %v268
        %v270 = vsub.f32 1.0, %v269
        %v271 = vmul.f32 %v268, %v270
        %v272 = vadd.f32 %v268, %v271
        %vm273 = vweird.f32 %v255
        %vm274 = vweird.f32 %v268
        %vm275 = vmor %vm273, %vm274
        %v276 = vsel %vm275, %v268, %v272
        %v277 = vand.u32 2147483647, %v255
        %vm278 = vcmp.eq.f32.partialorder %v277, 8.507059e+37
        %v279 = vand.u32 %v255, 2147483648
        %v280 = vor.u32 1.1754944e-38, %v279
        %v281 = vsel %vm278, %v280, %v276
        %v282 = vmul.f32 %v264, %v281
        %v283 = vsub.f32 1.0, %v282
        %v284 = vmul.f32 %v283, %v283
        %v285 = vmul.f32 %v265, %v284
        %v286 = vmul.f32 %v285, %v267
        %s287 = smul.u32 %s24, 3
        %s288 = sadd.s32 %s287, %s25
        %v289 = vlaneseq
        %v290 = vand.u32 %v289, 127
        %s291 = smul.u32 %s288, 128
        %v292 = vstv %s291
        %v293 = vadd.s32 %v292, %v290
        %vm294 = vcmp.lt.s32.totalorder %v293, 300
        %v295 = vsel %vm294, %v286, 0.0
        %v296 = vld [vmem:[#allocation2] sm:$0x1]
        %vm297 = vcmask 1040384
        %v298 = vsel %vm297, %v295, 0.0
        %299 = vadd.xlane.f32.xlu0 %v298
        %v300 = vpop.xlane.xlu0 %299
        %v301 = vadd.f32 %v296, %v300
        %vm302 = vcmask 0
        %303 = vst.msk [vmem:[#allocation2] sm:$0x1] %vm302, %v301
        %p304 = scmp.eq.s32.totalorder %s25, 2
        // Predicated region
        $region41: #{tpu_custom_call.1} parent=27 // pred_check
          %p305 = pneg %p304
        $region42: #{tpu_custom_call.1} parent=27 // pred_check_branch
          %307 = sbr.rel (%p305) target = $region44
        $region43: #{tpu_custom_call.1} parent=27 // pred_region
          %v308 = vld [vmem:[#allocation2] sm:$0x1]
          %v310 = vperm.slane %v308, 0
          %311 = vset.pattern.permute.xlu0 0
          %312 = vperm.xlu0 %311, %v310
          %v313 = vpop.permute.xlu0 %312
          %315 = vst [vmem:[#allocation8] sm:$0xff] %v313
        $region44: #{tpu_custom_call.1} parent=27 // pred_fallthru
          _
        // Predicated region
        $region45: #{tpu_custom_call.1} parent=27 // pred_check
          %p316 = pneg %p118
        $region46: #{tpu_custom_call.1} parent=27 // pred_check_branch
          %318 = sbr.rel (%p316) target = $region48
        $region47: #{tpu_custom_call.1} parent=27 // pred_region
          %320 = vsyncadd [#allocation5], 0
          %s321 = smul.addr %s24, 8
          %s322 = scalar_lea.hbm %s2, %s321
          %s324 = sshll.u32 [#allocation8], 4
          %s325 = int_to_ptr.vmem [resolvable:$true] %s324
          %s326 = sshll.u32 %s322, 4
          %s327 = int_to_ptr.hbm [resolvable:$true] %s326
          %329 = dma.vmem_to_hbm [thread:$0]  %s325, 128, %s327, [#allocation5]
        $region48: #{tpu_custom_call.1} parent=27 // pred_fallthru
          _
        // Predicated region
        $region49: #{tpu_custom_call.1} parent=27 // pred_check
          %p330 = pneg %p118
        $region50: #{tpu_custom_call.1} parent=27 // pred_check_branch
          %332 = sbr.rel (%p330) target = $region52
        $region51: #{tpu_custom_call.1} parent=27 // pred_region
          %334 = dma.done [#allocation5], 128
        $region52: #{tpu_custom_call.1} parent=27 // pred_fallthru
          _
      $region28: #{tpu_custom_call.1} parent=5 // pred_fallthru
        _
      %p335 = scmp.le.s32.totalorder 2, %s15
      // Predicated region
      $region53: #{tpu_custom_call.1} parent=5 // pred_check
        %p336 = pneg %p335
      $region54: #{tpu_custom_call.1} parent=5 // pred_check_branch
        %338 = sbr.rel (%p336) target = $region56
      $region55: #{tpu_custom_call.1} parent=5 // pred_region
        %s339 = ssub.s32 %s15, 2
      $region56: #{tpu_custom_call.1} parent=5 // pred_fallthru
        _
    $region6: #{tpu_custom_call.1} parent=1 // loop_footer
      %s19 = sadd.s32 1, %s15
    $region7: #{tpu_custom_call.1} parent=1 // loop_footer_branch
      %14 = sbr.rel target = $region3
    $region8: #{tpu_custom_call.1} parent=1 // loop_exit
      _
    %340 = vsyncpa [#allocation4], 1
    %s341 = scalar_lea.sflag [#allocation4], 1
    %342 = vsyncpa %s341, 1
    %343 = vsyncpa [#allocation7], 1
    %s344 = scalar_lea.sflag [#allocation7], 1
    %345 = vsyncpa %s344, 1
    %346 = vsyncpa [#allocation5], 1
    %s347 = scalar_lea.sflag [#allocation5], 1
    %348 = vsyncpa %s347, 1

</llo_original>
